<compile_context>
chip_gen: v7x
topology: tpu7x:2x2x1
jax: 0.10.0
libtpu: 0.0.40
codegen_flags: <defaults>
</compile_context>

<pallas_src>
import math

import jax
import jax.numpy as jnp
from jax.experimental import pallas as pl
from jax.experimental.pallas import tpu as pltpu


def _pos_enc_kernel(x_ref, pe_ref, o_ref):
    # x_ref/o_ref: (Bb, TM, D); pe_ref: (TM, D), broadcast over the batch block.
    o_ref[...] = x_ref[...] + pe_ref[...][None]


def make_positional_encoding(max_len, d_model, dtype=jnp.float32):
    """Builds the (max_len, d_model) sinusoidal table exactly as the PyTorch module."""
    assert d_model % 2 == 0, "d_model must be even (matches module default 256)"
    position = jnp.arange(max_len, dtype=jnp.float32)[:, None]          # (L, 1)
    div_term = jnp.exp(
        jnp.arange(0, d_model, 2, dtype=jnp.float32) * (-math.log(10000.0) / d_model)
    )                                                                    # (D/2,)
    ang = position * div_term                                            # (L, D/2)
    pe = jnp.zeros((max_len, d_model), jnp.float32)
    pe = pe.at[:, 0::2].set(jnp.sin(ang))
    pe = pe.at[:, 1::2].set(jnp.cos(ang))
    return pe.astype(dtype)


def positional_encoding_forward(x, pe, *, row_tile=2048):
    """x: (B, L, D), pe: (max_len >= L, D).  Returns x + pe[:L] broadcast over batch."""
    B, L, D = x.shape
    assert pe.ndim == 2 and pe.shape[1] == D and pe.shape[0] >= L, (
        "pe must be (max_len >= seq_len, d_model)"
    )
    pe = pe[:L].astype(x.dtype)

    itemsize = x.dtype.itemsize
    sub = {4: 8, 2: 16, 1: 32}[itemsize]   # sublane multiple for second-to-last dim

    # Row tile: full sequence if it fits one tile (block dim == full array dim is
    # always legal), else a sublane-aligned tile; Pallas masks the ragged last
    # block, so the wrapper never pads x nor slices the output.
    if L <= row_tile:
        tm = L
    else:
        tm = max(sub, (row_tile // sub) * sub)
    n_row_tiles = pl.cdiv(L, tm)

    # Pack multiple batches per step when the row tile is small (small-L / big-B
    # regime) so each step still moves a reasonably sized DMA.
    bb = max(1, min(B, row_tile // tm))
    # Guarantee >=2 grid steps where possible (v7x has 2 TensorCores per chip).
    if n_row_tiles * pl.cdiv(B, bb) < 2 and B > 1:
        bb = pl.cdiv(B, 2)
    n_batch_tiles = pl.cdiv(B, bb)

    # Explicit VMEM budget: double-buffered x / out / pe tiles + headroom, capped
    # below v7x's 64 MiB physical VMEM so the same config is portable.
    x_tile_bytes = bb * tm * D * itemsize
    pe_tile_bytes = tm * D * itemsize
    vmem_limit = int(
        min(
            48 * 1024 * 1024,
            max(8 * 1024 * 1024, 4 * x_tile_bytes + 2 * pe_tile_bytes + 4 * 1024 * 1024),
        )
    )

    # Grid: row tiles outer, batch inner.  pe's index_map is constant along the
    # innermost axis, so Pallas skips re-issuing its DMA for consecutive batches.
    return pl.pallas_call(
        _pos_enc_kernel,
        out_shape=jax.ShapeDtypeStruct((B, L, D), x.dtype),
        grid=(n_row_tiles, n_batch_tiles),
        in_specs=[
            pl.BlockSpec((bb, tm, D), lambda t, b: (b, t, 0)),   # x tile
            pl.BlockSpec((tm, D), lambda t, b: (t, 0)),          # pe tile (reused over batch)
        ],
        out_specs=pl.BlockSpec((bb, tm, D), lambda t, b: (b, t, 0)),
        compiler_params=pltpu.CompilerParams(
            dimension_semantics=("parallel", "parallel"),
            vmem_limit_bytes=vmem_limit,
        ),
    )(x, pe)


def _reference_forward(x, pe):
    return x + pe[None].astype(x.dtype)


if __name__ == "__main__":
    key = jax.random.PRNGKey(0)

    # Module defaults (already small): d_model=256, max_len=100; batch=2.
    B, max_len, d_model = 2, 100, 256

    x = jax.random.normal(key, (B, max_len, d_model), jnp.float32)
    pe = make_positional_encoding(max_len, d_model)

    out = positional_encoding_forward(x, pe)
    out = jax.block_until_ready(out)

    ref = _reference_forward(x, pe)
    assert out.shape == (B, max_len, d_model)
    assert jnp.allclose(out, ref, atol=1e-6, rtol=1e-6)

    # Sanity-check a non-divisible, multi-tile configuration too (ragged edge
    # handled by Pallas masking, no wrapper-side pad/slice).
    L2 = 1000
    x2 = jax.random.normal(jax.random.PRNGKey(1), (3, L2, d_model), jnp.float32)
    pe2 = make_positional_encoding(L2, d_model)
    out2 = jax.block_until_ready(positional_encoding_forward(x2, pe2, row_tile=256))
    assert jnp.allclose(out2, _reference_forward(x2, pe2), atol=1e-6, rtol=1e-6)

    print("KERNEL_OK")
</pallas_src>

<mosaic_0001>
module attributes {stable_mosaic.version = 11 : i64} {
  func.func @_pos_enc_kernel(%arg0: i32, %arg1: i32, %arg2: memref<1x100x256xf32, #tpu.memory_space<vmem>>, %arg3: memref<100x256xf32, #tpu.memory_space<vmem>>, %arg4: memref<1x100x256xf32, #tpu.memory_space<vmem>>) attributes {dimension_semantics = [#tpu.dimension_semantics<parallel>, #tpu.dimension_semantics<parallel>], iteration_bounds = array<i64: 1, 2>, scalar_prefetch = 0 : i64, scratch_operands = 0 : i64, tpu.core_type = #tpu.core_type<tc>, window_params = [{transform_indices = @transform_0, window_bounds = array<i64: 1, 100, 256>}, {transform_indices = @transform_1, window_bounds = array<i64: 100, 256>}, {transform_indices = @transform_2, window_bounds = array<i64: 1, 100, 256>}]} {
    %c0 = arith.constant 0 : index
    %c0_0 = arith.constant 0 : index
    %c0_1 = arith.constant 0 : index
    %0 = vector.load %arg2[%c0, %c0_0, %c0_1] : memref<1x100x256xf32, #tpu.memory_space<vmem>>, vector<1x100x256xf32>
    %c0_2 = arith.constant 0 : index
    %c0_3 = arith.constant 0 : index
    %1 = vector.load %arg3[%c0_2, %c0_3] : memref<100x256xf32, #tpu.memory_space<vmem>>, vector<100x256xf32>
    %2 = vector.shape_cast %1 : vector<100x256xf32> to vector<1x100x256xf32>
    %3 = arith.addf %0, %2 : vector<1x100x256xf32>
    %c0_4 = arith.constant 0 : index
    %c0_5 = arith.constant 0 : index
    %c0_6 = arith.constant 0 : index
    %4 = vector.load %arg4[%c0_4, %c0_5, %c0_6] : memref<1x100x256xf32, #tpu.memory_space<vmem>>, vector<1x100x256xf32>
    tpu.vector_store %arg4[%c0_4, %c0_5, %c0_6], %3 {strides = array<i32>} : memref<1x100x256xf32, #tpu.memory_space<vmem>>, vector<1x100x256xf32>,
    return
  }
  func.func @transform_0(%arg0: i32, %arg1: i32) -> (i32, i32, i32) {
    %c0_i32 = arith.constant 0 : i32
    %c0_i32_0 = arith.constant 0 : i32
    return %arg1, %arg0, %c0_i32 : i32, i32, i32
  }
  func.func @transform_1(%arg0: i32, %arg1: i32) -> (i32, i32) {
    %c0_i32 = arith.constant 0 : i32
    %c0_i32_0 = arith.constant 0 : i32
    return %arg0, %c0_i32 : i32, i32
  }
  func.func @transform_2(%arg0: i32, %arg1: i32) -> (i32, i32, i32) {
    %c0_i32 = arith.constant 0 : i32
    %c0_i32_0 = arith.constant 0 : i32
    return %arg1, %arg0, %c0_i32 : i32, i32, i32
  }
}

</mosaic_0001>

<llo_original>
// kernel: tpu_custom_call.1
$region0: #{tpu_custom_call.1}
  #allocation0 [shape = 'u32[]', space=smem, size = 0x4, offset = 0x4, fixed_abs, tag = 'smem constant byte address 0x4 - core index']
  #allocation1 [shape = 'u32[144,128]{1,0:T(1,128)}', space=vmem, size = 0x12000, scoped, tag = 'internal scratch']
  %s0 = inlined_call_operand.vmem [shape: f32[2,100,256], index: 0, kind: input, shape index: {}]
  %s1 = inlined_call_operand.vmem [shape: f32[100,256], index: 1, kind: input, shape index: {}]
  %s2 = inlined_call_operand.vmem [shape: f32[2,100,256], index: 2, kind: output, shape index: {}]
  %s3 = sld [smem:[#allocation0]]
  $region41: #{tpu_custom_call.1} parent=0
    _
  %s5 = ssub.s32 1, %s3
  %s6 = scalar_select 0, %s5, %s3
  loop: start=0, step=1, limit=4
  $region2: #{tpu_custom_call.1} parent=0 // loop_pre_header
    _
  $region3: #{tpu_custom_call.1} parent=0 // loop_header
    %s8 = sphi 0, %s12
    %p9 = scmp.ge.s32.totalorder %s8, 4
    %s15 = sphi 0, %s27
    %s16 = sphi 0, %s23
    %s17 = sphi 0, %s15
    %s18 = sphi 0, %s16
    %s19 = sphi 0, %s17
    %s20 = sphi 0, %s18
    %s32 = sphi 0, %s34
    %s35 = sphi 0, %s32
    %s36 = sphi 0, %s35
    %s52 = sphi 0, %s36
    %s58 = sphi 0, %s60
    %s61 = sphi 0, %s58
    %s62 = sphi 0, %s61
    %s78 = sphi 0, %s62
    %s86 = sphi 0, %s88
    %s89 = sphi 0, %s86
    %s90 = sphi 0, %s89
    %s106 = sphi 0, %s90
  $region4: #{tpu_custom_call.1} parent=0 // loop_header_branch
    %11 = sbr.rel (%p9) target = $region8
  $region5: #{tpu_custom_call.1} parent=0 // loop_body
    %s13 = ssub.s32 %s8, 1
    %s14 = ssub.s32 %s8, 2
    %s21 = sadd.s32 1, %s16
    %p22 = scmp.ge.s32.totalorder %s21, 2
    %s23 = scalar_select %p22, 0, %s21
    %s24 = sadd.s32 1, %s15
    %s25 = scalar_select %p22, %s24, %s15
    %p26 = scmp.ge.s32.totalorder %s25, 1
    %s27 = scalar_select %p26, 0, %s25
    %s28 = ssub.s32 %s16, %s23
    %s29 = ssub.s32 %s15, %s27
    %s30 = sor.u32 %s28, %s29
    %p31 = scmp.eq.s32.totalorder %s30, 0
    %s33 = sadd.s32 %s32, 1
    %s34 = scalar_select %p31, %s32, %s33
    %p37 = pneg %p31
    %p38 = scmp.eq.s32.totalorder %s8, 1
    %p39 = por %p37, %p38
    %p40 = scmp.ne.s32.totalorder %s32, %s35
    %p41 = scmp.eq.s32.totalorder %s8, 0
    %p42 = por %p40, %p41
    %p43 = scmp.ne.s32.totalorder %s32, %s35
    %p44 = scmp.eq.s32.totalorder %s13, 1
    %p45 = por %p43, %p44
    %p46 = scmp.ne.s32.totalorder %s35, %s36
    %p47 = scmp.eq.s32.totalorder %s13, 0
    %p48 = por %p46, %p47
    %p49 = scmp.ne.s32.totalorder %s35, %s36
    %p50 = scmp.eq.s32.totalorder %s14, 1
    %p51 = por %p49, %p50
    %p53 = scmp.ne.s32.totalorder %s36, %s52
    %p54 = scmp.eq.s32.totalorder %s14, 0
    %p55 = por %p53, %p54
    %s56 = ssub.s32 %s15, %s27
    %p57 = scmp.eq.s32.totalorder %s56, 0
    %s59 = sadd.s32 %s58, 1
    %s60 = scalar_select %p57, %s58, %s59
    %p63 = pneg %p57
    %p64 = scmp.eq.s32.totalorder %s8, 1
    %p65 = por %p63, %p64
    %p66 = scmp.ne.s32.totalorder %s58, %s61
    %p67 = scmp.eq.s32.totalorder %s8, 0
    %p68 = por %p66, %p67
    %p69 = scmp.ne.s32.totalorder %s58, %s61
    %p70 = scmp.eq.s32.totalorder %s13, 1
    %p71 = por %p69, %p70
    %p72 = scmp.ne.s32.totalorder %s61, %s62
    %p73 = scmp.eq.s32.totalorder %s13, 0
    %p74 = por %p72, %p73
    %p75 = scmp.ne.s32.totalorder %s61, %s62
    %p76 = scmp.eq.s32.totalorder %s14, 1
    %p77 = por %p75, %p76
    %p79 = scmp.ne.s32.totalorder %s62, %s78
    %p80 = scmp.eq.s32.totalorder %s14, 0
    %p81 = por %p79, %p80
    %s82 = ssub.s32 %s16, %s23
    %s83 = ssub.s32 %s15, %s27
    %s84 = sor.u32 %s82, %s83
    %p85 = scmp.eq.s32.totalorder %s84, 0
    %s87 = sadd.s32 %s86, 1
    %s88 = scalar_select %p85, %s86, %s87
    %p91 = pneg %p85
    %p92 = scmp.eq.s32.totalorder %s8, 1
    %p93 = por %p91, %p92
    %p94 = scmp.ne.s32.totalorder %s86, %s89
    %p95 = scmp.eq.s32.totalorder %s8, 0
    %p96 = por %p94, %p95
    %p97 = scmp.ne.s32.totalorder %s86, %s89
    %p98 = scmp.eq.s32.totalorder %s13, 1
    %p99 = por %p97, %p98
    %p100 = scmp.ne.s32.totalorder %s89, %s90
    %p101 = scmp.eq.s32.totalorder %s13, 0
    %p102 = por %p100, %p101
    %p103 = scmp.ne.s32.totalorder %s89, %s90
    %p104 = scmp.eq.s32.totalorder %s14, 1
    %p105 = por %p103, %p104
    %p107 = scmp.ne.s32.totalorder %s90, %s106
    %p108 = scmp.eq.s32.totalorder %s14, 0
    %p109 = por %p107, %p108
    %p110 = scmp.le.s32.totalorder 1, %s8
    %p111 = scmp.lt.s32.totalorder %s8, 3
    %p112 = pnand %p110, %p111
    %p113 = pneg %p112
    // Predicated region
    $region9: #{tpu_custom_call.1} parent=5 // pred_check
      _
    $region10: #{tpu_custom_call.1} parent=5 // pred_check_branch
      %115 = sbr.rel (%p112) target = $region12
    $region11: #{tpu_custom_call.1} parent=5 // pred_region
      %s116 = ssub.s32 %s8, 1
      // Predicated region
      $region13: #{tpu_custom_call.1} parent=11 // pred_check
        %p117 = pneg %p74
      $region14: #{tpu_custom_call.1} parent=11 // pred_check_branch
        %119 = sbr.rel (%p117) target = $region16
      $region15: #{tpu_custom_call.1} parent=11 // pred_region
        %s120 = smul.u32 13, %s17
        %p121 = scmp.lt.s32.totalorder %s120, 12
        %s122 = scalar_select %p121, %s120, 12
        %s123 = smul.addr %s122, 2
        %s124 = smul.addr %s123, 8
        %s125 = scalar_lea.vmem %s1, %s124
        %s126 = smul.u32 13, %s17
      $region16: #{tpu_custom_call.1} parent=11 // pred_fallthru
        _
    $region12: #{tpu_custom_call.1} parent=5 // pred_fallthru
      _
    %p127 = scmp.lt.s32.totalorder %s8, 2
    // Predicated region
    $region17: #{tpu_custom_call.1} parent=5 // pred_check
      %p128 = pneg %p127
    $region18: #{tpu_custom_call.1} parent=5 // pred_check_branch
      %130 = sbr.rel (%p128) target = $region20
    $region19: #{tpu_custom_call.1} parent=5 // pred_region
      // Predicated region
      $region21: #{tpu_custom_call.1} parent=19 // pred_check
        %p131 = pneg %p42
      $region22: #{tpu_custom_call.1} parent=19 // pred_check_branch
        %133 = sbr.rel (%p131) target = $region24
      $region23: #{tpu_custom_call.1} parent=19 // pred_region
        %s134 = smul.u32 13, %s15
        %p135 = scmp.lt.s32.totalorder %s16, 1
        %s136 = scalar_select %p135, %s16, 1
        %p137 = scmp.lt.s32.totalorder %s134, 12
        %s138 = scalar_select %p137, %s134, 12
        %s139 = smul.addr %s138, 2
        %s140 = smul.addr %s136, 26
        %s141 = sadd.s32 %s139, %s140
        %s142 = smul.addr %s141, 8
        %s143 = scalar_lea.vmem %s0, %s142
        %s144 = smul.u32 13, %s15
      $region24: #{tpu_custom_call.1} parent=19 // pred_fallthru
        _
    $region20: #{tpu_custom_call.1} parent=5 // pred_fallthru
      _
    %p145 = scmp.le.s32.totalorder 1, %s8
    %p146 = scmp.lt.s32.totalorder %s8, 3
    %p147 = pnand %p145, %p146
    %p148 = pneg %p147
    // Predicated region
    $region25: #{tpu_custom_call.1} parent=5 // pred_check
      _
    $region26: #{tpu_custom_call.1} parent=5 // pred_check_branch
      %150 = sbr.rel (%p147) target = $region28
    $region27: #{tpu_custom_call.1} parent=5 // pred_region
      %s151 = ssub.s32 %s8, 1
      %s152 = smul.u32 13, %s17
      %p153 = scmp.lt.s32.totalorder %s18, 1
      %s154 = scalar_select %p153, %s18, 1
      %p155 = scmp.lt.s32.totalorder %s152, 12
      %s156 = scalar_select %p155, %s152, 12
      %s157 = smul.addr %s156, 2
      %s158 = smul.addr %s154, 26
      %s159 = sadd.s32 %s157, %s158
      %s160 = smul.addr %s159, 8
      %s161 = scalar_lea.vmem %s0, %s160
      %p162 = pneg %p48
      %p163 = pneg %p45
      %s164 = smul.u32 13, %s17
      %p165 = scmp.lt.s32.totalorder %s164, 12
      %s166 = scalar_select %p165, %s164, 12
      %s167 = smul.addr %s166, 2
      %s168 = smul.addr %s167, 8
      %s169 = scalar_lea.vmem %s1, %s168
      %p170 = pneg %p74
      %p171 = pneg %p71
      %p172 = pneg %p102
      %p173 = pneg %p99
      %s174 = smul.u32 13, %s17
      %p175 = scmp.lt.s32.totalorder %s18, 1
      %s176 = scalar_select %p175, %s18, 1
      %p177 = scmp.lt.s32.totalorder %s174, 12
      %s178 = scalar_select %p177, %s174, 12
      %s179 = smul.addr %s178, 2
      %s180 = smul.addr %s176, 26
      %s181 = sadd.s32 %s179, %s180
      %s182 = smul.addr %s181, 8
      %s183 = scalar_lea.vmem %s2, %s182
      %s184 = smul.u32 13, %s17
      %p185 = scmp.lt.s32.totalorder %s18, 1
      %s186 = scalar_select %p185, %s18, 1
      %p187 = scmp.lt.s32.totalorder %s184, 12
      %s188 = scalar_select %p187, %s184, 12
      %s189 = smul.addr %s188, 2
      %s190 = smul.addr %s186, 26
      %s191 = sadd.s32 %s189, %s190
      %s192 = smul.addr %s191, 8
      %s193 = scalar_lea.vmem %s0, %s192
      %s194 = smul.u32 13, %s17
      %s195 = smul.u32 13, %s17
      %p196 = scmp.lt.s32.totalorder %s195, 12
      %s197 = scalar_select %p196, %s195, 12
      %s198 = smul.addr %s197, 2
      %s199 = smul.addr %s198, 8
      %s200 = scalar_lea.vmem %s1, %s199
      %s201 = smul.u32 13, %s17
      %s202 = smul.u32 13, %s17
      %p203 = scmp.lt.s32.totalorder %s18, 1
      %s204 = scalar_select %p203, %s18, 1
      %p205 = scmp.lt.s32.totalorder %s202, 12
      %s206 = scalar_select %p205, %s202, 12
      %s207 = smul.addr %s206, 2
      %s208 = smul.addr %s204, 26
      %s209 = sadd.s32 %s207, %s208
      %s210 = smul.addr %s209, 8
      %s211 = scalar_lea.vmem %s2, %s210
      %s212 = smul.u32 13, %s17
      %v213 = vld [vmem:[%s193] sm:$0xff]
      %v214 = vld [vmem:[%s193 + $0x8] sm:$0xff]
      %v215 = vld [vmem:[%s193 + $0x10] sm:$0xff]
      %v216 = vld [vmem:[%s193 + $0x18] sm:$0xff]
      %v217 = vld [vmem:[%s193 + $0x20] sm:$0xff]
      %v218 = vld [vmem:[%s193 + $0x28] sm:$0xff]
      %v219 = vld [vmem:[%s193 + $0x30] sm:$0xff]
      %v220 = vld [vmem:[%s193 + $0x38] sm:$0xff]
      %v221 = vld [vmem:[%s193 + $0x40] sm:$0xff]
      %v222 = vld [vmem:[%s193 + $0x48] sm:$0xff]
      %v223 = vld [vmem:[%s193 + $0x50] sm:$0xff]
      %v224 = vld [vmem:[%s193 + $0x58] sm:$0xff]
      %v225 = vld [vmem:[%s193 + $0x60] sm:$0xff]
      %v226 = vld [vmem:[%s193 + $0x68] sm:$0xff]
      %v227 = vld [vmem:[%s193 + $0x70] sm:$0xff]
      %v228 = vld [vmem:[%s193 + $0x78] sm:$0xff]
      %v229 = vld [vmem:[%s193 + $0x80] sm:$0xff]
      %v230 = vld [vmem:[%s193 + $0x88] sm:$0xff]
      %v231 = vld [vmem:[%s193 + $0x90] sm:$0xff]
      %v232 = vld [vmem:[%s193 + $0x98] sm:$0xff]
      %v233 = vld [vmem:[%s193 + $0xa0] sm:$0xff]
      %v234 = vld [vmem:[%s193 + $0xa8] sm:$0xff]
      %v235 = vld [vmem:[%s193 + $0xb0] sm:$0xff]
      %v236 = vld [vmem:[%s193 + $0xb8] sm:$0xff]
      %v237 = vld [vmem:[%s193 + $0xc0] sm:$0xf]
      %v238 = vld [vmem:[%s193 + $0xc8] sm:$0xf]
      %v239 = vld [vmem:[%s200] sm:$0xff]
      %v240 = vld [vmem:[%s200 + $0x8] sm:$0xff]
      %v241 = vld [vmem:[%s200 + $0x10] sm:$0xff]
      %v242 = vld [vmem:[%s200 + $0x18] sm:$0xff]
      %v243 = vld [vmem:[%s200 + $0x20] sm:$0xff]
      %v244 = vld [vmem:[%s200 + $0x28] sm:$0xff]
      %v245 = vld [vmem:[%s200 + $0x30] sm:$0xff]
      %v246 = vld [vmem:[%s200 + $0x38] sm:$0xff]
      %v247 = vld [vmem:[%s200 + $0x40] sm:$0xff]
      %v248 = vld [vmem:[%s200 + $0x48] sm:$0xff]
      %v249 = vld [vmem:[%s200 + $0x50] sm:$0xff]
      %v250 = vld [vmem:[%s200 + $0x58] sm:$0xff]
      %v251 = vld [vmem:[%s200 + $0x60] sm:$0xff]
      %v252 = vld [vmem:[%s200 + $0x68] sm:$0xff]
      %v253 = vld [vmem:[%s200 + $0x70] sm:$0xff]
      %v254 = vld [vmem:[%s200 + $0x78] sm:$0xff]
      %v255 = vld [vmem:[%s200 + $0x80] sm:$0xff]
      %v256 = vld [vmem:[%s200 + $0x88] sm:$0xff]
      %v257 = vld [vmem:[%s200 + $0x90] sm:$0xff]
      %v258 = vld [vmem:[%s200 + $0x98] sm:$0xff]
      %v259 = vld [vmem:[%s200 + $0xa0] sm:$0xff]
      %v260 = vld [vmem:[%s200 + $0xa8] sm:$0xff]
      %v261 = vld [vmem:[%s200 + $0xb0] sm:$0xff]
      %v262 = vld [vmem:[%s200 + $0xb8] sm:$0xff]
      %v263 = vld [vmem:[%s200 + $0xc0] sm:$0xf]
      %v264 = vld [vmem:[%s200 + $0xc8] sm:$0xf]
      %v265 = vadd.f32 %v213, %v239
      %v266 = vadd.f32 %v214, %v240
      %v267 = vadd.f32 %v215, %v241
      %v268 = vadd.f32 %v216, %v242
      %v269 = vadd.f32 %v217, %v243
      %v270 = vadd.f32 %v218, %v244
      %v271 = vadd.f32 %v219, %v245
      %v272 = vadd.f32 %v220, %v246
      %v273 = vadd.f32 %v221, %v247
      %v274 = vadd.f32 %v222, %v248
      %v275 = vadd.f32 %v223, %v249
      %v276 = vadd.f32 %v224, %v250
      %v277 = vadd.f32 %v225, %v251
      %v278 = vadd.f32 %v226, %v252
      %v279 = vadd.f32 %v227, %v253
      %v280 = vadd.f32 %v228, %v254
      %v281 = vadd.f32 %v229, %v255
      %v282 = vadd.f32 %v230, %v256
      %v283 = vadd.f32 %v231, %v257
      %v284 = vadd.f32 %v232, %v258
      %v285 = vadd.f32 %v233, %v259
      %v286 = vadd.f32 %v234, %v260
      %v287 = vadd.f32 %v235, %v261
      %v288 = vadd.f32 %v236, %v262
      %v289 = vadd.f32 %v237, %v263
      %v290 = vadd.f32 %v238, %v264
      %291 = vst [vmem:[%s211] sm:$0xff] %v265
      %292 = vst [vmem:[%s211 + $0x8] sm:$0xff] %v266
      %293 = vst [vmem:[%s211 + $0x10] sm:$0xff] %v267
      %294 = vst [vmem:[%s211 + $0x18] sm:$0xff] %v268
      %295 = vst [vmem:[%s211 + $0x20] sm:$0xff] %v269
      %296 = vst [vmem:[%s211 + $0x28] sm:$0xff] %v270
      %297 = vst [vmem:[%s211 + $0x30] sm:$0xff] %v271
      %298 = vst [vmem:[%s211 + $0x38] sm:$0xff] %v272
      %299 = vst [vmem:[%s211 + $0x40] sm:$0xff] %v273
      %300 = vst [vmem:[%s211 + $0x48] sm:$0xff] %v274
      %301 = vst [vmem:[%s211 + $0x50] sm:$0xff] %v275
      %302 = vst [vmem:[%s211 + $0x58] sm:$0xff] %v276
      %303 = vst [vmem:[%s211 + $0x60] sm:$0xff] %v277
      %304 = vst [vmem:[%s211 + $0x68] sm:$0xff] %v278
      %305 = vst [vmem:[%s211 + $0x70] sm:$0xff] %v279
      %306 = vst [vmem:[%s211 + $0x78] sm:$0xff] %v280
      %307 = vst [vmem:[%s211 + $0x80] sm:$0xff] %v281
      %308 = vst [vmem:[%s211 + $0x88] sm:$0xff] %v282
      %309 = vst [vmem:[%s211 + $0x90] sm:$0xff] %v283
      %310 = vst [vmem:[%s211 + $0x98] sm:$0xff] %v284
      %311 = vst [vmem:[%s211 + $0xa0] sm:$0xff] %v285
      %312 = vst [vmem:[%s211 + $0xa8] sm:$0xff] %v286
      %313 = vst [vmem:[%s211 + $0xb0] sm:$0xff] %v287
      %314 = vst [vmem:[%s211 + $0xb8] sm:$0xff] %v288
      %315 = vst [vmem:[%s211 + $0xc0] sm:$0xf] %v289
      %316 = vst [vmem:[%s211 + $0xc8] sm:$0xf] %v290
      %s317 = smul.u32 13, %s17
      %p318 = scmp.lt.s32.totalorder %s18, 1
      %s319 = scalar_select %p318, %s18, 1
      %p320 = scmp.lt.s32.totalorder %s317, 12
      %s321 = scalar_select %p320, %s317, 12
      %s322 = smul.addr %s321, 2
      %s323 = smul.addr %s319, 26
      %s324 = sadd.s32 %s322, %s323
      %s325 = smul.addr %s324, 8
      %s326 = scalar_lea.vmem %s2, %s325
      // Predicated region
      $region29: #{tpu_custom_call.1} parent=27 // pred_check
        %p327 = pneg %p99
      $region30: #{tpu_custom_call.1} parent=27 // pred_check_branch
        %329 = sbr.rel (%p327) target = $region32
      $region31: #{tpu_custom_call.1} parent=27 // pred_region
        %s330 = smul.u32 13, %s17
      $region32: #{tpu_custom_call.1} parent=27 // pred_fallthru
        _
    $region28: #{tpu_custom_call.1} parent=5 // pred_fallthru
      _
    %p331 = scmp.le.s32.totalorder 2, %s8
    // Predicated region
    $region33: #{tpu_custom_call.1} parent=5 // pred_check
      %p332 = pneg %p331
    $region34: #{tpu_custom_call.1} parent=5 // pred_check_branch
      %334 = sbr.rel (%p332) target = $region36
    $region35: #{tpu_custom_call.1} parent=5 // pred_region
      %s335 = ssub.s32 %s8, 2
      // Predicated region
      $region37: #{tpu_custom_call.1} parent=35 // pred_check
        %p336 = pneg %p105
      $region38: #{tpu_custom_call.1} parent=35 // pred_check_branch
        %338 = sbr.rel (%p336) target = $region40
      $region39: #{tpu_custom_call.1} parent=35 // pred_region
        %s339 = smul.u32 13, %s19
        %p340 = scmp.lt.s32.totalorder %s20, 1
        %s341 = scalar_select %p340, %s20, 1
        %p342 = scmp.lt.s32.totalorder %s339, 12
        %s343 = scalar_select %p342, %s339, 12
        %s344 = smul.addr %s343, 2
        %s345 = smul.addr %s341, 26
        %s346 = sadd.s32 %s344, %s345
        %s347 = smul.addr %s346, 8
        %s348 = scalar_lea.vmem %s2, %s347
      $region40: #{tpu_custom_call.1} parent=35 // pred_fallthru
        _
    $region36: #{tpu_custom_call.1} parent=5 // pred_fallthru
      _
  $region6: #{tpu_custom_call.1} parent=0 // loop_footer
    %s12 = sadd.s32 1, %s8
  $region7: #{tpu_custom_call.1} parent=0 // loop_footer_branch
    %7 = sbr.rel target = $region3
  $region8: #{tpu_custom_call.1} parent=0 // loop_exit
    _

</llo_original>
